<compile_context>
chip_gen: v5e
topology: v5e:2x2
jax: 0.10.0
libtpu: 0.0.40
codegen_flags: <defaults>
</compile_context>

<pallas_src>
import functools

import jax
import jax.numpy as jnp
from jax.experimental import pallas as pl
from jax.experimental.pallas import tpu as pltpu


# ----------------------------------------------------------------------------
# Fused Pallas kernel: whole batch, single invocation, everything in VMEM.
# ----------------------------------------------------------------------------
def _deeplab_fused_kernel(p_ref, w1_ref, w2_ref, bil_ref, o_ref, *,
                          n_batch, s_feat):
    """Shapes:
      p_ref  : (K1+1, N*S)        bf16  im2col patches, batch on lanes,
                                        last row == 1 (bias fold)
      w1_ref : (Cfeat+1, K1+1)    bf16  [[W1 | b1], [0 ... 0 | 1]]
      w2_ref : (ncls_pad, Cfeat+1)bf16  [[W2 | b2], zero pad rows]
      bil_ref: (S, P)             bf16  kron(Wh, Ww)^T bilinear weights
      o_ref  : (N*ncls_pad, P)    f32   lane-dense output, row = n*ncls_pad + c
    """
    # --- backbone: conv3x3/s2 as matmul (bias folded) + ReLU -----------------
    feats = jnp.dot(w1_ref[...], p_ref[...],
                    preferred_element_type=jnp.float32)        # (Cfeat+1, N*S)
    feats = jnp.maximum(feats, 0.0).astype(jnp.bfloat16)       # ones row stays 1

    # --- classifier: 1x1 conv as matmul (bias folded via ones row) ----------
    logits = jnp.dot(w2_ref[...], feats,
                     preferred_element_type=jnp.float32)       # (ncls_pad, N*S)

    # --- fold batch from lanes into M for the upsample matmul ---------------
    # (ncls_pad, N*S) -> (N*ncls_pad, S): static lane slices + sublane concat.
    logits_m = jnp.concatenate(
        [logits[:, n * s_feat:(n + 1) * s_feat] for n in range(n_batch)],
        axis=0)                                                # (N*ncls_pad, S)

    # --- bilinear upsample (align_corners=False) as one matmul --------------
    out = jnp.dot(logits_m.astype(jnp.bfloat16), bil_ref[...],
                  preferred_element_type=jnp.float32)          # (N*ncls_pad, P)
    o_ref[...] = out


# ----------------------------------------------------------------------------
# Plain-JAX glue (tiny, one-shot layout prep; fuses to a handful of XLA ops)
# ----------------------------------------------------------------------------
def _im2col_T(x, kh, kw, stride, pad):
    """x: (N, C, H, W) -> transposed patches (N, C*kh*kw, Ho*Wo).

    Row ordering is c*kh*kw + i*kw + j, matching w.reshape(Cout, -1).
    """
    N, C, H, W = x.shape
    xp = jnp.pad(x, ((0, 0), (0, 0), (pad, pad), (pad, pad)))
    Ho = (H + 2 * pad - kh) // stride + 1
    Wo = (W + 2 * pad - kw) // stride + 1
    taps = [xp[:, :, i:i + stride * Ho:stride, j:j + stride * Wo:stride]
            for i in range(kh) for j in range(kw)]
    pT = jnp.stack(taps, axis=2).reshape(N, C * kh * kw, Ho * Wo)
    return pT, Ho, Wo


def _bilinear_matrix(in_size, out_size):
    """Dense [out_size, in_size] 1-D interpolation matrix matching
    F.interpolate(mode='bilinear', align_corners=False) along one axis."""
    scale = in_size / out_size
    i = jnp.arange(out_size, dtype=jnp.float32)
    src = (i + 0.5) * scale - 0.5
    src = jnp.maximum(src, 0.0)                        # PyTorch clamps negatives
    idx0 = jnp.clip(jnp.floor(src).astype(jnp.int32), 0, in_size - 1)
    idx1 = jnp.clip(idx0 + 1, 0, in_size - 1)
    frac = src - idx0.astype(jnp.float32)
    rows = jnp.arange(out_size)
    W = jnp.zeros((out_size, in_size), jnp.float32)
    W = W.at[rows, idx0].add(1.0 - frac)
    W = W.at[rows, idx1].add(frac)
    return W


# ----------------------------------------------------------------------------
# DeepLabModel.forward
# ----------------------------------------------------------------------------
def deeplab_forward(x, params):
    N, Cin, H, W = x.shape
    w1, b1, w2, b2 = params["w1"], params["b1"], params["w2"], params["b2"]
    Cfeat = w1.shape[0]
    ncls = w2.shape[0]
    ncls_pad = ((ncls + 7) // 8) * 8            # pad classes to sublane multiple

    # im2col on an already-bf16 input: one bf16 materialization; pad/slice/stack
    # fuse into a single XLA fusion under jit.
    x_bf = x.astype(jnp.bfloat16)
    pT, Ho, Wo = _im2col_T(x_bf, 3, 3, stride=2, pad=1)   # (N, K1, S) bf16
    K1, S, P, NS = Cin * 9, Ho * Wo, H * W, N * (Ho * Wo)

    # Batch folded onto lanes: (K1, N*S); append ones row for the bias fold.
    patches = pT.transpose(1, 0, 2).reshape(K1, NS)
    patches_aug = jnp.concatenate(
        [patches, jnp.ones((1, NS), jnp.bfloat16)], axis=0)          # (K1+1, NS)

    # Backbone weight with bias column + carrier row: [[W1 | b1], [0...0 | 1]].
    w1m = jnp.concatenate([w1.reshape(Cfeat, K1), b1.reshape(Cfeat, 1)], axis=1)
    carrier = jnp.concatenate(
        [jnp.zeros((1, K1), jnp.float32), jnp.ones((1, 1), jnp.float32)], axis=1)
    w1_aug = jnp.concatenate([w1m, carrier], axis=0).astype(jnp.bfloat16)

    # Classifier weight with bias column, zero-padded to ncls_pad rows.
    w2m = jnp.concatenate([w2.reshape(ncls, Cfeat), b2.reshape(ncls, 1)], axis=1)
    w2_aug = (jnp.zeros((ncls_pad, Cfeat + 1), jnp.float32)
              .at[:ncls].set(w2m).astype(jnp.bfloat16))

    # Exact bilinear(align_corners=False) weights, folded separably into one
    # (S, P) matrix: out = logits @ kron(Wh, Ww)^T.  (Separable two-stage form
    # only needed at production sizes where this kron would not fit VMEM.)
    bilT = jnp.kron(_bilinear_matrix(Ho, H),
                    _bilinear_matrix(Wo, W)).T.astype(jnp.bfloat16)   # (S, P)

    kernel = functools.partial(_deeplab_fused_kernel, n_batch=N, s_feat=S)

    # No grid: whole batch in one invocation (per-step overhead paid once);
    # all operands are whole-array VMEM residents (~100 KiB total, well under
    # v7x's 64 MiB VMEM, so no pipelining/double-buffering concerns).
    out_flat = pl.pallas_call(
        kernel,
        out_shape=jax.ShapeDtypeStruct((N * ncls_pad, P), jnp.float32),
        compiler_params=pltpu.CompilerParams(
            vmem_limit_bytes=32 * 1024 * 1024),
    )(patches_aug, w1_aug, w2_aug, bilT)

    # Free contiguous reshape back to NCHW; drop the padded class rows.
    return out_flat.reshape(N, ncls_pad, H, W)[:, :ncls]


# ----------------------------------------------------------------------------
# Pure-JAX f32 reference (same math, XLA path) for a sanity check
# ----------------------------------------------------------------------------
def _reference_forward(x, params):
    N, Cin, H, W = x.shape
    w1, b1, w2, b2 = params["w1"], params["b1"], params["w2"], params["b2"]
    Cfeat, ncls = w1.shape[0], w2.shape[0]
    pT, Ho, Wo = _im2col_T(x, 3, 3, stride=2, pad=1)
    feats = jnp.einsum("fk,nks->nfs", w1.reshape(Cfeat, -1), pT)
    feats = jnp.maximum(feats + b1[None, :, None], 0.0)
    logits = jnp.einsum("cf,nfs->ncs", w2.reshape(ncls, Cfeat), feats)
    logits = logits + b2[None, :, None]
    bil = jnp.kron(_bilinear_matrix(Ho, H), _bilinear_matrix(Wo, W))  # (H*W, Ho*Wo)
    out = jnp.einsum("ncs,ps->ncp", logits, bil)
    return out.reshape(N, ncls, H, W)


def init_params(key, cin=4, cfeat=8, n_cls=6):
    k1, k2, k3, k4 = jax.random.split(key, 4)
    return {
        "w1": 0.1 * jax.random.normal(k1, (cfeat, cin, 3, 3), jnp.float32),
        "b1": 0.1 * jax.random.normal(k2, (cfeat,), jnp.float32),
        "w2": 0.1 * jax.random.normal(k3, (n_cls, cfeat, 1, 1), jnp.float32),
        "b2": 0.1 * jax.random.normal(k4, (n_cls,), jnp.float32),
    }


if __name__ == "__main__":
    key = jax.random.PRNGKey(0)
    kx, kp = jax.random.split(key)
    x = jax.random.normal(kx, (2, 4, 16, 16), jnp.float32)      # NCHW input
    params = init_params(kp)

    out = jax.jit(deeplab_forward)(x, params)
    out = jax.block_until_ready(out)

    assert out.shape == (2, 6, 16, 16), out.shape
    assert bool(jnp.all(jnp.isfinite(out)))

    # Sanity check against the f32 reference (bf16 MXU operands -> loose tol).
    ref = _reference_forward(x, params)
    max_err = float(jnp.max(jnp.abs(out - ref)))
    assert max_err < 5e-2, max_err

    print("KERNEL_OK")
</pallas_src>

<mosaic_0001>
module attributes {stable_mosaic.version = 11 : i64} {
  func.func @_deeplab_fused_kernel(%arg0: memref<37x128xbf16, #tpu.memory_space<vmem>>, %arg1: memref<9x37xbf16, #tpu.memory_space<vmem>>, %arg2: memref<8x9xbf16, #tpu.memory_space<vmem>>, %arg3: memref<64x256xbf16, #tpu.memory_space<vmem>>, %arg4: memref<16x256xf32, #tpu.memory_space<vmem>>) attributes {dimension_semantics = [], scalar_prefetch = 0 : i64, scratch_operands = 0 : i64, tpu.core_type = #tpu.core_type<tc>} {
    %c0 = arith.constant 0 : index
    %c0_0 = arith.constant 0 : index
    %0 = vector.load %arg1[%c0, %c0_0] : memref<9x37xbf16, #tpu.memory_space<vmem>>, vector<9x37xbf16>
    %c0_1 = arith.constant 0 : index
    %c0_2 = arith.constant 0 : index
    %1 = vector.load %arg0[%c0_1, %c0_2] : memref<37x128xbf16, #tpu.memory_space<vmem>>, vector<37x128xbf16>
    %cst = arith.constant dense<0.000000e+00> : vector<9x128xf32>
    %2 = tpu.matmul %0, %1, %cst {dimension_numbers = #tpu.dot_dimension_numbers<[1], [0], [0], [1], [0, 0, 1, 1], [], []>} : vector<9x37xbf16>, vector<37x128xbf16>, vector<9x128xf32> -> vector<9x128xf32>
    %cst_3 = arith.constant 0.000000e+00 : f32
    %3 = vector.broadcast %cst_3 : f32 to vector<9x128xf32>
    %4 = arith.maximumf %2, %3 : vector<9x128xf32>
    %5 = arith.truncf %4 : vector<9x128xf32> to vector<9x128xbf16>
    %c0_4 = arith.constant 0 : index
    %c0_5 = arith.constant 0 : index
    %6 = vector.load %arg2[%c0_4, %c0_5] : memref<8x9xbf16, #tpu.memory_space<vmem>>, vector<8x9xbf16>
    %cst_6 = arith.constant dense<0.000000e+00> : vector<8x128xf32>
    %7 = tpu.matmul %6, %5, %cst_6 {dimension_numbers = #tpu.dot_dimension_numbers<[1], [0], [0], [1], [0, 0, 1, 1], [], []>} : vector<8x9xbf16>, vector<9x128xbf16>, vector<8x128xf32> -> vector<8x128xf32>
    %8 = vector.extract_strided_slice %7 {offsets = [0, 0], sizes = [8, 64], strides = [1, 1]} : vector<8x128xf32> to vector<8x64xf32>
    %9 = vector.extract_strided_slice %7 {offsets = [0, 64], sizes = [8, 64], strides = [1, 1]} : vector<8x128xf32> to vector<8x64xf32>
    %10 = tpu.concatenate %8, %9 in 0 : vector<8x64xf32>, vector<8x64xf32> -> vector<16x64xf32>
    %11 = arith.truncf %10 : vector<16x64xf32> to vector<16x64xbf16>
    %c0_7 = arith.constant 0 : index
    %c0_8 = arith.constant 0 : index
    %12 = vector.load %arg3[%c0_7, %c0_8] : memref<64x256xbf16, #tpu.memory_space<vmem>>, vector<64x256xbf16>
    %cst_9 = arith.constant dense<0.000000e+00> : vector<16x256xf32>
    %13 = tpu.matmul %11, %12, %cst_9 {dimension_numbers = #tpu.dot_dimension_numbers<[1], [0], [0], [1], [0, 0, 1, 1], [], []>} : vector<16x64xbf16>, vector<64x256xbf16>, vector<16x256xf32> -> vector<16x256xf32>
    %c0_10 = arith.constant 0 : index
    %c0_11 = arith.constant 0 : index
    %14 = vector.load %arg4[%c0_10, %c0_11] : memref<16x256xf32, #tpu.memory_space<vmem>>, vector<16x256xf32>
    tpu.vector_store %arg4[%c0_10, %c0_11], %13 {strides = array<i32>} : memref<16x256xf32, #tpu.memory_space<vmem>>, vector<16x256xf32>,
    return
  }
}

</mosaic_0001>

<llo_original>
// kernel: deeplab_forward.1
$region0: #{deeplab_forward.1}
  #allocation0 [shape = 'u32[]', space=smem, size = 0x4, offset = 0x4, fixed_abs, tag = 'smem constant byte address 0x4 - core index']
  #allocation1 [shape = 'u32[72,128]{1,0:T(1,128)}', space=vmem, size = 0x9000, scoped, tag = 'internal scratch']
  %s0 = inlined_call_operand.vmem [shape: bf16[37,128], index: 0, kind: input, shape index: {}]
  %s1 = inlined_call_operand.vmem [shape: bf16[9,37], index: 1, kind: input, shape index: {}]
  %s2 = inlined_call_operand.vmem [shape: bf16[8,9], index: 2, kind: input, shape index: {}]
  %s3 = inlined_call_operand.vmem [shape: bf16[64,256], index: 3, kind: input, shape index: {}]
  %s4 = inlined_call_operand.vmem [shape: f32[16,256], index: 4, kind: output, shape index: {}]
  %s5 = sld [smem:[#allocation0]]
  $region26: #{deeplab_forward.1} parent=0
    _
  %s7 = ssub.s32 1, %s5
  %s8 = scalar_select 0, %s7, %s5
  // Predicated region
  $region2: #{deeplab_forward.1} parent=0 // pred_check
    _
  $region3: #{deeplab_forward.1} parent=0 // pred_check_branch
    %10 = sbr.rel (0) target = $region5
  $region4: #{deeplab_forward.1} parent=0 // pred_region
    _
  $region5: #{deeplab_forward.1} parent=0 // pred_fallthru
    _
  // Predicated region
  $region6: #{deeplab_forward.1} parent=0 // pred_check
    _
  $region7: #{deeplab_forward.1} parent=0 // pred_check_branch
    %12 = sbr.rel (0) target = $region9
  $region8: #{deeplab_forward.1} parent=0 // pred_region
    _
  $region9: #{deeplab_forward.1} parent=0 // pred_fallthru
    _
  // Predicated region
  $region10: #{deeplab_forward.1} parent=0 // pred_check
    _
  $region11: #{deeplab_forward.1} parent=0 // pred_check_branch
    %14 = sbr.rel (0) target = $region13
  $region12: #{deeplab_forward.1} parent=0 // pred_region
    _
  $region13: #{deeplab_forward.1} parent=0 // pred_fallthru
    _
  // Predicated region
  $region14: #{deeplab_forward.1} parent=0 // pred_check
    _
  $region15: #{deeplab_forward.1} parent=0 // pred_check_branch
    %16 = sbr.rel (0) target = $region17
  $region16: #{deeplab_forward.1} parent=0 // pred_region
    _
  $region17: #{deeplab_forward.1} parent=0 // pred_fallthru
    _
  %v18 = vld [vmem:[%s1] sm:$0xf]
  %v19 = vld [vmem:[%s1 + $0x4] sm:$0x1]
  %v20 = vld [vmem:[%s0] sm:$0xf]
  %v21 = vld [vmem:[%s0 + $0x4] sm:$0xf]
  %v22 = vld [vmem:[%s0 + $0x8] sm:$0xf]
  %v23 = vld [vmem:[%s0 + $0xc] sm:$0xf]
  %v24 = vld [vmem:[%s0 + $0x10] sm:$0x7]
  %v27 = vunpack.c.l.b16 %v18
  %v28 = vunpack.c.l.b16 %v19
  %v29 = vpack.c.b16 %v28, %v27
  %v35 = vunpack.c.l.b16 %v20
  %v36 = vunpack.c.l.b16 %v21
  %v37 = vunpack.c.l.b16 %v22
  %v38 = vunpack.c.l.b16 %v23
  %v39 = vunpack.c.l.b16 %v24
  %v40 = vpack.c.b16 %v36, %v35
  %v41 = vpack.c.b16 %v38, %v37
  %v42 = vpack.c.b16 %v39, %v39
  %vm45 = vcmask 302080
  %v47 = vsel %vm45, %v29, 0
  %vm49 = vcmask 1041408
  %vm50 = vcmask 1042432
  %v51 = vsel %vm49, 4294967295, 65535
  %v52 = vsel %vm50, %v51, 0
  %v54 = vand.u32 %v42, %v52
  %56 = vmatpush.bf16.msra.mxu0 0
  %57 = vmatpush.bf16.msra.mxu0 0
  %58 = vmatpush.bf16.msra.mxu0 0
  %59 = vmatpush.bf16.msra.mxu0 0
  %60 = vmatpush.bf16.msra.mxu0 0
  %61 = vmatpush.bf16.msra.mxu0 %v54
  %62 = vmatpush.bf16.msra.mxu0 %v41
  %63 = vmatpush.bf16.msra.mxu0 %v40
  %64 = vmatmul.bf16.gmra.mxu0 %v47
  %v65 = vpop.f32.mrf.mxu0
  %v66 = vadd.f32 0.0, %v65
  %v67 = vpop.f32.mrf.mxu0
  %v68 = vadd.f32 0.0, %v67
  %69 = vdwg.mxu0
  %v70 = vmax.f32 %v66, 0.0
  %v71 = vmax.f32 %v68, 0.0
  %v72 = vpack.c.bf16 %v71, %v70
  %v73 = vld [vmem:[%s2] sm:$0xf]
  %vm74 = vcmask 72704
  %v76 = vsel %vm74, %v73, 0
  %vm78 = vcmask 1043456
  %vm79 = vcmask 1044480
  %v80 = vsel %vm78, 4294967295, 65535
  %v81 = vsel %vm79, %v80, 0
  %v83 = vand.u32 %v72, %v81
  %85 = vmatpush.bf16.msra.mxu0 0
  %86 = vmatpush.bf16.msra.mxu0 0
  %87 = vmatpush.bf16.msra.mxu0 0
  %88 = vmatpush.bf16.msra.mxu0 0
  %89 = vmatpush.bf16.msra.mxu0 0
  %90 = vmatpush.bf16.msra.mxu0 0
  %91 = vmatpush.bf16.msra.mxu0 0
  %92 = vmatpush.bf16.msra.mxu0 %v83
  %93 = vmatmul.bf16.gmra.mxu0 %v76
  %v94 = vpop.f32.mrf.mxu0
  %v95 = vadd.f32 0.0, %v94
  %v96 = vpop.f32.mrf.mxu0
  %97 = vdwg.mxu0
  %99 = vrot.lane.b32.xlu0 %v95, 64
  %v100 = vpop.permute.xlu0 %99
  %v102 = vpack.c.bf16 %v100, %v95
  %v103 = vld [vmem:[%s3] sm:$0xff]
  %v104 = vld [vmem:[%s3 + $0x8] sm:$0xff]
  %v105 = vld [vmem:[%s3 + $0x10] sm:$0xff]
  %v106 = vld [vmem:[%s3 + $0x18] sm:$0xff]
  %v107 = vld [vmem:[%s3 + $0x20] sm:$0xff]
  %v108 = vld [vmem:[%s3 + $0x28] sm:$0xff]
  %v109 = vld [vmem:[%s3 + $0x30] sm:$0xff]
  %v110 = vld [vmem:[%s3 + $0x38] sm:$0xff]
  %v119 = vunpack.c.l.b16 %v103
  %v120 = vunpack.c.h.b16 %v103
  %v121 = vunpack.c.l.b16 %v104
  %v122 = vunpack.c.h.b16 %v104
  %v123 = vunpack.c.l.b16 %v105
  %v124 = vunpack.c.h.b16 %v105
  %v125 = vunpack.c.l.b16 %v106
  %v126 = vunpack.c.h.b16 %v106
  %v127 = vunpack.c.l.b16 %v107
  %v128 = vunpack.c.h.b16 %v107
  %v129 = vunpack.c.l.b16 %v108
  %v130 = vunpack.c.h.b16 %v108
  %v131 = vunpack.c.l.b16 %v109
  %v132 = vunpack.c.h.b16 %v109
  %v133 = vunpack.c.l.b16 %v110
  %v134 = vunpack.c.h.b16 %v110
  %v135 = vpack.c.b16 %v121, %v119
  %v136 = vpack.c.b16 %v122, %v120
  %v137 = vpack.c.b16 %v125, %v123
  %v138 = vpack.c.b16 %v126, %v124
  %v139 = vpack.c.b16 %v129, %v127
  %v140 = vpack.c.b16 %v130, %v128
  %v141 = vpack.c.b16 %v133, %v131
  %v142 = vpack.c.b16 %v134, %v132
  %vm151 = vcmask 523264
  %v153 = vsel %vm151, %v102, 0
  %155 = vmatpush.bf16.msra.mxu0 0
  %156 = vmatpush.bf16.msra.mxu0 0
  %157 = vmatpush.bf16.msra.mxu0 0
  %158 = vmatpush.bf16.msra.mxu0 0
  %159 = vmatpush.bf16.msra.mxu0 %v141
  %160 = vmatpush.bf16.msra.mxu0 %v139
  %161 = vmatpush.bf16.msra.mxu0 %v137
  %162 = vmatpush.bf16.msra.mxu0 %v135
  %163 = vmatmul.bf16.gmra.mxu0 %v153
  %v164 = vpop.f32.mrf.mxu0
  %v165 = vadd.f32 0.0, %v164
  %v166 = vpop.f32.mrf.mxu0
  %v167 = vadd.f32 0.0, %v166
  %168 = vdwg.mxu0
  %169 = vmatpush.bf16.msra.mxu0 0
  %170 = vmatpush.bf16.msra.mxu0 0
  %171 = vmatpush.bf16.msra.mxu0 0
  %172 = vmatpush.bf16.msra.mxu0 0
  %173 = vmatpush.bf16.msra.mxu0 %v142
  %174 = vmatpush.bf16.msra.mxu0 %v140
  %175 = vmatpush.bf16.msra.mxu0 %v138
  %176 = vmatpush.bf16.msra.mxu0 %v136
  %177 = vmatmul.bf16.gmra.mxu0 %v153
  %v178 = vpop.f32.mrf.mxu0
  %v179 = vadd.f32 0.0, %v178
  %v180 = vpop.f32.mrf.mxu0
  %v181 = vadd.f32 0.0, %v180
  %182 = vdwg.mxu0
  %183 = vst [vmem:[%s4] sm:$0xff] %v165
  %184 = vst [vmem:[%s4 + $0x8] sm:$0xff] %v179
  %185 = vst [vmem:[%s4 + $0x10] sm:$0xff] %v167
  %186 = vst [vmem:[%s4 + $0x18] sm:$0xff] %v181
  // Predicated region
  $region18: #{deeplab_forward.1} parent=0 // pred_check
    _
  $region19: #{deeplab_forward.1} parent=0 // pred_check_branch
    %188 = sbr.rel (0) target = $region21
  $region20: #{deeplab_forward.1} parent=0 // pred_region
    _
  $region21: #{deeplab_forward.1} parent=0 // pred_fallthru
    _
  // Predicated region
  $region22: #{deeplab_forward.1} parent=0 // pred_check
    _
  $region23: #{deeplab_forward.1} parent=0 // pred_check_branch
    %190 = sbr.rel (0) target = $region25
  $region24: #{deeplab_forward.1} parent=0 // pred_region
    _
  $region25: #{deeplab_forward.1} parent=0 // pred_fallthru
    _

</llo_original>
